<compile_context>
chip_gen: v5e
topology: v5e:2x2
jax: 0.10.0
libtpu: 0.0.40
codegen_flags: <defaults>
</compile_context>

<pallas_src>
import functools

import jax
import jax.numpy as jnp
from jax import lax
from jax.experimental import pallas as pl
from jax.experimental.pallas import tpu as pltpu


def _round_up(x, m):
    return ((x + m - 1) // m) * m


def _mf_kernel(zg_ref, w_ref, mu_ref, out_ref, *, glm):
    """One (TB, TP) output tile of  X_recon = z[idx] @ W.T + mu  (+ GLM link).

    zg_ref : (TB, K_pad)  pre-gathered z rows for this batch tile
    w_ref  : (TP, K_pad)  tile of W (contracted on K via transposed-RHS -> no .T)
    mu_ref : (1, TP)      bias tile (f32), broadcast over rows
    """
    recon = lax.dot_general(
        zg_ref[...], w_ref[...],
        dimension_numbers=(((1,), (1,)), ((), ())),   # contract both operands on K
        preferred_element_type=jnp.float32)
    recon = recon + mu_ref[...]

    # GLM link (static python branch, baked at trace time).
    if glm == "bernoulli":
        recon = jax.nn.sigmoid(recon)
    elif glm == "poisson":
        recon = jnp.exp(recon)   # matches torch.exp (may overflow to inf for large logits)
    # glm None / "gaussian" -> identity

    out_ref[...] = recon.astype(out_ref.dtype)


def mf_forward(X, indices, z, W, mu, glm=None, compute_dtype=None,
               output_dtype=jnp.float32):
    """Pallas implementation of _MFModule.forward(X, indices).

    compute_dtype: dtype of the z/W matmul operands (e.g. jnp.bfloat16 to halve DMA
    bytes and double MXU rate); accumulation is always f32.  Defaults to the parameter
    dtype (f32 => exact torch semantics).
    output_dtype: dtype of the returned reconstruction (bf16 halves the dominant
    output-write HBM traffic when downstream allows).
    """
    del X  # unused by the reference forward
    B = int(indices.shape[0])
    N, K = z.shape
    P, Kw = W.shape
    assert Kw == K, "W must be (P, K)"
    cdtype = compute_dtype if compute_dtype is not None else z.dtype

    # ---- tile selection first, then pad B/P up to multiples of the tiles ----------
    B_pad8 = _round_up(B, 8)
    TB = B_pad8 if B_pad8 <= 256 else 256          # full-height MXU tiles for large B
    B_pad = _round_up(B, TB)

    P_pad128 = _round_up(P, 128)
    TP = P_pad128 if P_pad128 <= 1024 else 512     # wide, lane-dense unmasked stores
    P_pad = _round_up(P, TP)

    # Small K: zero-pad to 128 so z/W loads are lane-dense (padded cols contribute 0).
    K_pad = _round_up(K, 128) if K < 128 else K

    # ---- wrapper-side prep: clamp+pad indices, gather z rows, pad params -----------
    idx = jnp.clip(indices.astype(jnp.int32), 0, N - 1)
    idx = jnp.pad(idx, (0, B_pad - B))                               # pad rows -> row 0

    z_c = jnp.pad(z.astype(cdtype), ((0, 0), (0, K_pad - K)))        # (N, K_pad)
    z_g = jnp.take(z_c, idx, axis=0)                                 # (B_pad, K_pad)
    W_c = jnp.pad(W.astype(cdtype), ((0, P_pad - P), (0, K_pad - K)))  # (P_pad, K_pad)
    mu2d = jnp.pad(mu.astype(jnp.float32), (0, P_pad - P)).reshape(1, P_pad)

    # ---- VMEM budget (double-buffered tiles), capped so it also fits v7x (64 MiB) --
    esz = jnp.dtype(cdtype).itemsize
    osz = jnp.dtype(output_dtype).itemsize
    tile_vmem = 2 * (TB * K_pad * esz + TP * K_pad * esz + TP * 4 + TB * TP * osz)
    vmem_limit = int(min(max(tile_vmem + (4 << 20), 32 << 20), 56 << 20))

    kernel = functools.partial(_mf_kernel, glm=glm)
    # P tiles OUTER, B tiles inner: W's block index is constant across the inner axis,
    # so each (TP, K) W tile is fetched from HBM once; only the tiny (TB, K_pad) z tile
    # is re-fetched per step.
    grid = (P_pad // TP, B_pad // TB)

    # TODO(synk): 'orthogonal'/'nonnegative' parametrizations and the gaussian `scale`
    # parameter only re-map parameters at init/training time; the forward math is
    # unchanged, so handle them by preprocessing z/W/mu before this call.
    out = pl.pallas_call(
        kernel,
        out_shape=jax.ShapeDtypeStruct((B_pad, P_pad), output_dtype),
        grid_spec=pl.GridSpec(
            grid=grid,
            in_specs=[
                pl.BlockSpec((TB, K_pad), lambda j, i: (i, 0)),   # gathered z rows
                pl.BlockSpec((TP, K_pad), lambda j, i: (j, 0)),   # W tile (const over i)
                pl.BlockSpec((1, TP),     lambda j, i: (0, j)),   # mu tile
            ],
            out_specs=pl.BlockSpec((TB, TP), lambda j, i: (i, j)),
        ),
        compiler_params=pltpu.CompilerParams(
            # No cross-step state anymore -> both axes independent / megacore-shardable.
            dimension_semantics=("parallel", "parallel"),
            vmem_limit_bytes=vmem_limit,
        ),
        cost_estimate=pl.CostEstimate(
            flops=2 * B_pad * P_pad * K_pad,
            transcendentals=(B_pad * P_pad if glm in ("bernoulli", "poisson") else 0),
            bytes_accessed=(z_g.size * esz + W_c.size * esz
                            + mu2d.size * 4 + B_pad * P_pad * osz),
        ),
    )(z_g, W_c, mu2d)

    return out[:B, :P]


if __name__ == "__main__":
    key = jax.random.PRNGKey(0)
    kz, kw, kmu, kidx, kx = jax.random.split(key, 5)

    # ---- test 1: small shapes, f32, identity + poisson links -------------------------
    N, P, K, B = 16, 128, 8, 8
    z = jax.random.normal(kz, (N, K), dtype=jnp.float32)
    W = jax.random.normal(kw, (P, K), dtype=jnp.float32)
    mu = jax.random.normal(kmu, (P,), dtype=jnp.float32)
    indices = jax.random.randint(kidx, (B,), 0, N, dtype=jnp.int32)
    X = jax.random.normal(kx, (B, P), dtype=jnp.float32)   # unused by forward (as in torch)

    out = jax.block_until_ready(mf_forward(X, indices, z, W, mu, glm=None))
    ref = z[indices, :] @ W.T + mu
    assert out.shape == (B, P) and out.dtype == jnp.float32
    assert jnp.allclose(out, ref, atol=1e-4, rtol=1e-4), "mismatch vs reference"

    out_p = jax.block_until_ready(mf_forward(X, indices, z, W, mu, glm="poisson"))
    assert jnp.allclose(out_p, jnp.exp(ref), atol=1e-3, rtol=1e-4), "mismatch vs poisson reference"

    # ---- test 2: ragged B/P (padding path), bernoulli link ----------------------------
    N2, P2, K2, B2 = 64, 640, 8, 20
    k2 = jax.random.split(key, 4)
    z2 = jax.random.normal(k2[0], (N2, K2), dtype=jnp.float32)
    W2 = jax.random.normal(k2[1], (P2, K2), dtype=jnp.float32)
    mu2 = jax.random.normal(k2[2], (P2,), dtype=jnp.float32)
    idx2 = jax.random.randint(k2[3], (B2,), 0, N2, dtype=jnp.int32)

    out2 = jax.block_until_ready(mf_forward(None, idx2, z2, W2, mu2, glm="bernoulli"))
    ref2 = jax.nn.sigmoid(z2[idx2, :] @ W2.T + mu2)
    assert out2.shape == (B2, P2)
    assert jnp.allclose(out2, ref2, atol=1e-4, rtol=1e-4), "mismatch vs bernoulli reference"

    # ---- test 3: multi-tile grid (B > TB, P > TP) with padding on both axes -----------
    N3, P3, K3, B3 = 100, 1200, 12, 520
    k3 = jax.random.split(kidx, 4)
    z3 = jax.random.normal(k3[0], (N3, K3), dtype=jnp.float32)
    W3 = jax.random.normal(k3[1], (P3, K3), dtype=jnp.float32)
    mu3 = jax.random.normal(k3[2], (P3,), dtype=jnp.float32)
    idx3 = jax.random.randint(k3[3], (B3,), 0, N3, dtype=jnp.int32)

    out3 = jax.block_until_ready(mf_forward(None, idx3, z3, W3, mu3, glm=None))
    ref3 = z3[idx3, :] @ W3.T + mu3
    assert out3.shape == (B3, P3)
    assert jnp.allclose(out3, ref3, atol=1e-3, rtol=1e-4), "mismatch vs multi-tile reference"

    # ---- test 4: bf16 compute path (half the z/W DMA bytes, 2x MXU rate) --------------
    out_bf = jax.block_until_ready(
        mf_forward(X, indices, z, W, mu, glm=None, compute_dtype=jnp.bfloat16))
    ref_bf = (z.astype(jnp.bfloat16).astype(jnp.float32)[indices, :]
              @ W.astype(jnp.bfloat16).astype(jnp.float32).T + mu)
    assert jnp.allclose(out_bf, ref_bf, atol=1e-2, rtol=1e-2), "mismatch vs bf16 reference"

    print("KERNEL_OK")
</pallas_src>

<mosaic_0001>
module attributes {stable_mosaic.version = 11 : i64} {
  func.func @_mf_kernel(%arg0: i32, %arg1: i32, %arg2: memref<8x128xf32, #tpu.memory_space<vmem>>, %arg3: memref<128x128xf32, #tpu.memory_space<vmem>>, %arg4: memref<1x128xf32, #tpu.memory_space<vmem>>, %arg5: memref<8x128xf32, #tpu.memory_space<vmem>>) attributes {dimension_semantics = [#tpu.dimension_semantics<parallel>, #tpu.dimension_semantics<parallel>], iteration_bounds = array<i64: 1, 1>, scalar_prefetch = 0 : i64, scratch_operands = 0 : i64, tpu.core_type = #tpu.core_type<tc>, window_params = [{transform_indices = @transform_0, window_bounds = array<i64: 8, 128>}, {transform_indices = @transform_1, window_bounds = array<i64: 128, 128>}, {transform_indices = @transform_2, window_bounds = array<i64: 1, 128>}, {transform_indices = @transform_3, window_bounds = array<i64: 8, 128>}]} {
    %c0 = arith.constant 0 : index
    %c0_0 = arith.constant 0 : index
    %0 = vector.load %arg2[%c0, %c0_0] : memref<8x128xf32, #tpu.memory_space<vmem>>, vector<8x128xf32>
    %c0_1 = arith.constant 0 : index
    %c0_2 = arith.constant 0 : index
    %1 = vector.load %arg3[%c0_1, %c0_2] : memref<128x128xf32, #tpu.memory_space<vmem>>, vector<128x128xf32>
    %cst = arith.constant dense<0.000000e+00> : vector<8x128xf32>
    %2 = tpu.matmul %0, %1, %cst {dimension_numbers = #tpu.dot_dimension_numbers<[1], [1], [0], [0], [0, 0, 1, 0], [], []>} : vector<8x128xf32>, vector<128x128xf32>, vector<8x128xf32> -> vector<8x128xf32>
    %c0_3 = arith.constant 0 : index
    %c0_4 = arith.constant 0 : index
    %3 = vector.load %arg4[%c0_3, %c0_4] : memref<1x128xf32, #tpu.memory_space<vmem>>, vector<1x128xf32>
    %4 = vector.broadcast %3 : vector<1x128xf32> to vector<8x128xf32>
    %5 = arith.addf %2, %4 : vector<8x128xf32>
    %c0_5 = arith.constant 0 : index
    %c0_6 = arith.constant 0 : index
    %6 = vector.load %arg5[%c0_5, %c0_6] : memref<8x128xf32, #tpu.memory_space<vmem>>, vector<8x128xf32>
    tpu.vector_store %arg5[%c0_5, %c0_6], %5 {strides = array<i32>} : memref<8x128xf32, #tpu.memory_space<vmem>>, vector<8x128xf32>,
    return
  }
  func.func @transform_0(%arg0: i32, %arg1: i32) -> (i32, i32) {
    %c0_i32 = arith.constant 0 : i32
    %c0_i32_0 = arith.constant 0 : i32
    return %arg1, %c0_i32 : i32, i32
  }
  func.func @transform_1(%arg0: i32, %arg1: i32) -> (i32, i32) {
    %c0_i32 = arith.constant 0 : i32
    %c0_i32_0 = arith.constant 0 : i32
    return %arg0, %c0_i32 : i32, i32
  }
  func.func @transform_2(%arg0: i32, %arg1: i32) -> (i32, i32) {
    %c0_i32 = arith.constant 0 : i32
    %c0_i32_0 = arith.constant 0 : i32
    return %c0_i32, %arg0 : i32, i32
  }
  func.func @transform_3(%arg0: i32, %arg1: i32) -> (i32, i32) {
    %c0_i32 = arith.constant 0 : i32
    return %arg1, %arg0 : i32, i32
  }
}

</mosaic_0001>

<llo_original>
// kernel: tpu_custom_call.1
$region0: #{tpu_custom_call.1}
  #allocation0 [shape = 'u32[]', space=smem, size = 0x4, offset = 0x4, fixed_abs, tag = 'smem constant byte address 0x4 - core index']
  #allocation1 [shape = 'u32[72,128]{1,0:T(1,128)}', space=vmem, size = 0x9000, scoped, tag = 'internal scratch']
  %s0 = inlined_call_operand.hbm [shape: f32[8,128], index: 0, kind: input, shape index: {}]
  %s1 = inlined_call_operand.hbm [shape: f32[128,128], index: 1, kind: input, shape index: {}]
  %s2 = inlined_call_operand.vmem [shape: f32[1,128], index: 2, kind: input, shape index: {}]
  %s3 = inlined_call_operand.hbm [shape: f32[8,128], index: 3, kind: output, shape index: {}]
  %s4 = sld [smem:[#allocation0]]
  $region30: #{tpu_custom_call.1} parent=0
    _
  %s6 = ssub.s32 1, %s4
  %s7 = scalar_select 0, %s6, %s4
  $region1: #{tpu_custom_call.1} parent=0
    #allocation2 [shape = 'u8[4096]{0}', space=vmem, size = 0x1000, scoped, tag = 'input window, operand 0, single buffered']
    #allocation3 [shape = 's32[1]{0}', space=sflag, size = 0x4, scoped, tag = 'scoped memory for tpu_custom_call.1']
    #allocation4 [shape = 's32[1]{0}', space=sflag, size = 0x4, scoped, tag = 'scoped memory for tpu_custom_call.1']
    #allocation5 [shape = 'u8[65536]{0}', space=vmem, size = 0x10000, scoped, tag = 'input window, operand 1, single buffered']
    #allocation6 [shape = 's32[1]{0}', space=sflag, size = 0x4, scoped, tag = 'scoped memory for tpu_custom_call.1']
    #allocation7 [shape = 'u8[4096]{0}', space=vmem, size = 0x1000, scoped, tag = 'output window, operand 0, single buffered']
    %8 = vsyncpa [#allocation3], 0
    %9 = vsyncpa [#allocation6], 0
    %10 = vsyncpa [#allocation4], 0
    // Predicated region
    $region2: #{tpu_custom_call.1} parent=1 // pred_check
      _
    $region3: #{tpu_custom_call.1} parent=1 // pred_check_branch
      %12 = sbr.rel (0) target = $region5
    $region4: #{tpu_custom_call.1} parent=1 // pred_region
      %14 = vsyncadd [#allocation3], 0
      %s16 = sshll.u32 %s0, 4
      %s17 = int_to_ptr.hbm [resolvable:$true] %s16
      %s18 = sshll.u32 [#allocation2], 4
      %s19 = int_to_ptr.vmem [resolvable:$true] %s18
      %21 = dma.hbm_to_vmem [thread:$0]  %s17, 128, %s19, [#allocation3]
    $region5: #{tpu_custom_call.1} parent=1 // pred_fallthru
      _
    // Predicated region
    $region6: #{tpu_custom_call.1} parent=1 // pred_check
      _
    $region7: #{tpu_custom_call.1} parent=1 // pred_check_branch
      %23 = sbr.rel (0) target = $region9
    $region8: #{tpu_custom_call.1} parent=1 // pred_region
      %25 = vsyncadd [#allocation6], 0
      %s26 = sshll.u32 %s1, 4
      %s27 = int_to_ptr.hbm [resolvable:$true] %s26
      %s28 = sshll.u32 [#allocation5], 4
      %s29 = int_to_ptr.vmem [resolvable:$true] %s28
      %34 = dma.hbm_to_vmem [thread:$0]  %s27, 2048, %s29, [#allocation6], 128, 128, 8
    $region9: #{tpu_custom_call.1} parent=1 // pred_fallthru
      _
    // Predicated region
    $region10: #{tpu_custom_call.1} parent=1 // pred_check
      _
    $region11: #{tpu_custom_call.1} parent=1 // pred_check_branch
      %36 = sbr.rel (0) target = $region13
    $region12: #{tpu_custom_call.1} parent=1 // pred_region
      _
    $region13: #{tpu_custom_call.1} parent=1 // pred_fallthru
      _
    // Predicated region
    $region14: #{tpu_custom_call.1} parent=1 // pred_check
      _
    $region15: #{tpu_custom_call.1} parent=1 // pred_check_branch
      %38 = sbr.rel (0) target = $region17
    $region16: #{tpu_custom_call.1} parent=1 // pred_region
      %40 = dma.done [#allocation3], 128
    $region17: #{tpu_custom_call.1} parent=1 // pred_fallthru
      _
    // Predicated region
    $region18: #{tpu_custom_call.1} parent=1 // pred_check
      _
    $region19: #{tpu_custom_call.1} parent=1 // pred_check_branch
      %42 = sbr.rel (0) target = $region21
    $region20: #{tpu_custom_call.1} parent=1 // pred_region
      %44 = dma.done [#allocation6], 2048
    $region21: #{tpu_custom_call.1} parent=1 // pred_fallthru
      _
    %v45 = vld [vmem:[#allocation2] sm:$0xff]
    %v46 = vld [vmem:[#allocation5] sm:$0xff]
    %v47 = vld [vmem:[#allocation5 + $0x8] sm:$0xff]
    %v48 = vld [vmem:[#allocation5 + $0x10] sm:$0xff]
    %v49 = vld [vmem:[#allocation5 + $0x18] sm:$0xff]
    %v50 = vld [vmem:[#allocation5 + $0x20] sm:$0xff]
    %v51 = vld [vmem:[#allocation5 + $0x28] sm:$0xff]
    %v52 = vld [vmem:[#allocation5 + $0x30] sm:$0xff]
    %v53 = vld [vmem:[#allocation5 + $0x38] sm:$0xff]
    %v54 = vld [vmem:[#allocation5 + $0x40] sm:$0xff]
    %v55 = vld [vmem:[#allocation5 + $0x48] sm:$0xff]
    %v56 = vld [vmem:[#allocation5 + $0x50] sm:$0xff]
    %v57 = vld [vmem:[#allocation5 + $0x58] sm:$0xff]
    %v58 = vld [vmem:[#allocation5 + $0x60] sm:$0xff]
    %v59 = vld [vmem:[#allocation5 + $0x68] sm:$0xff]
    %v60 = vld [vmem:[#allocation5 + $0x70] sm:$0xff]
    %v61 = vld [vmem:[#allocation5 + $0x78] sm:$0xff]
    %v62 = vld [vmem:[%s2] sm:$0x1]
    %v64 = vperm.slane %v62, 0
    %66 = vmatpush.xpose.msra.mxu0 %v61
    %67 = vmatpush.xpose.msra.mxu0 %v60
    %68 = vmatpush.xpose.msra.mxu0 %v59
    %69 = vmatpush.xpose.msra.mxu0 %v58
    %70 = vmatpush.xpose.msra.mxu0 %v57
    %71 = vmatpush.xpose.msra.mxu0 %v56
    %72 = vmatpush.xpose.msra.mxu0 %v55
    %73 = vmatpush.xpose.msra.mxu0 %v54
    %74 = vmatpush.xpose.msra.mxu0 %v53
    %75 = vmatpush.xpose.msra.mxu0 %v52
    %76 = vmatpush.xpose.msra.mxu0 %v51
    %77 = vmatpush.xpose.msra.mxu0 %v50
    %78 = vmatpush.xpose.msra.mxu0 %v49
    %79 = vmatpush.xpose.msra.mxu0 %v48
    %80 = vmatpush.xpose.msra.mxu0 %v47
    %81 = vmatpush.xpose.msra.mxu0 %v46
    %82 = vmatmul.f32.gmra.mxu0 %v45
    %v83 = vpop.f32.mrf.mxu0
    %v84 = vadd.f32 %v64, %v83
    %85 = vdwg.mxu0
    %86 = vst [vmem:[#allocation7] sm:$0xff] %v84
    // Predicated region
    $region22: #{tpu_custom_call.1} parent=1 // pred_check
      _
    $region23: #{tpu_custom_call.1} parent=1 // pred_check_branch
      %88 = sbr.rel (0) target = $region25
    $region24: #{tpu_custom_call.1} parent=1 // pred_region
      %90 = vsyncadd [#allocation4], 0
      %s92 = sshll.u32 [#allocation7], 4
      %s93 = int_to_ptr.vmem [resolvable:$true] %s92
      %s94 = sshll.u32 %s3, 4
      %s95 = int_to_ptr.hbm [resolvable:$true] %s94
      %97 = dma.vmem_to_hbm [thread:$0]  %s93, 128, %s95, [#allocation4]
    $region25: #{tpu_custom_call.1} parent=1 // pred_fallthru
      _
    // Predicated region
    $region26: #{tpu_custom_call.1} parent=1 // pred_check
      _
    $region27: #{tpu_custom_call.1} parent=1 // pred_check_branch
      %99 = sbr.rel (0) target = $region29
    $region28: #{tpu_custom_call.1} parent=1 // pred_region
      %101 = dma.done [#allocation4], 128
    $region29: #{tpu_custom_call.1} parent=1 // pred_fallthru
      _
    %102 = vsyncpa [#allocation3], 1
    %103 = vsyncpa [#allocation6], 1
    %104 = vsyncpa [#allocation4], 1

</llo_original>
